<compile_context>
chip_gen: v7x
topology: tpu7x:2x2x1
jax: 0.10.0
libtpu: 0.0.40
codegen_flags: <defaults>
</compile_context>

<pallas_src>
import jax
import jax.numpy as jnp
import numpy as np
from jax.experimental import pallas as pl
from jax.experimental.pallas import tpu as pltpu


# ---------------------------------------------------------------------------
# Kernel factory (traced per (N, has_coverage, activation dtype) variant)
# ---------------------------------------------------------------------------
def _make_kernel(N, has_coverage, act_dtype):
    def kernel(*refs):
        if has_coverage:
            (ctxs_ref, ctx_w_ref, hid_ref, dec_w_ref, b_ref,
             cov_ref, cov_w_ref, mlp_w_ref,
             att_ref, joint_ref, cov_out_ref) = refs
        else:
            (ctxs_ref, ctx_w_ref, hid_ref, dec_w_ref, b_ref, mlp_w_ref,
             att_ref, joint_ref, cov_out_ref) = refs

        # decoder projection with (fused) bias: (Bt, M), f32 accumulation
        dec = jnp.dot(hid_ref[...], dec_w_ref[...],
                      preferred_element_type=jnp.float32) + b_ref[...]
        mlp_w = mlp_w_ref[...]                                  # (1, M) f32
        if has_coverage:
            cov = cov_ref[...]                                  # (Bt, N) f32
            cov_w = cov_w_ref[...]                              # (1, M) f32

        # --- pass 1: per-modality energies (live data bounded to (Bt, M)) ---
        e_cols = []
        for n in range(N):
            pre = jnp.dot(ctxs_ref[n], ctx_w_ref[n],            # (Bt,D)x(D,M) MXU
                          preferred_element_type=jnp.float32) + dec
            if has_coverage:
                pre = pre + cov[:, n:n + 1] * cov_w             # (Bt,1)*(1,M)
            act = jnp.tanh(pre.astype(act_dtype))               # EUP (bf16 v6e/v7x)
            e_cols.append(jnp.sum(act.astype(jnp.float32) * mlp_w,
                                  axis=-1, keepdims=True))      # (Bt, 1)

        # --- softmax over the modality axis: list of N columns, no XLU ---
        m = e_cols[0]
        for c in e_cols[1:]:
            m = jnp.maximum(m, c)
        exps = [jnp.exp(c - m) for c in e_cols]
        denom = exps[0]
        for c in exps[1:]:
            denom = denom + c
        inv = pl.reciprocal(denom, approx=True)
        att_cols = [e * inv for e in exps]                      # N x (Bt, 1)

        att_blk = jnp.concatenate(att_cols, axis=1)             # (Bt, N)
        att_ref[...] = att_blk
        if has_coverage:
            cov_out_ref[...] = cov + att_blk
        else:
            cov_out_ref[...] = att_blk

        # --- pass 2: joint context accumulated per modality (no f32 ctxs copy)
        joint = att_cols[0] * ctxs_ref[0]                       # f32 * bf16 -> f32
        for n in range(1, N):
            joint = joint + att_cols[n] * ctxs_ref[n]
        joint_ref[...] = joint.astype(joint_ref.dtype)

    return kernel


# ---------------------------------------------------------------------------
# Generation-aware configuration helpers
# ---------------------------------------------------------------------------
def _round_up(x, m):
    return (x + m - 1) // m * m


def _tpu_generation():
    try:
        dev = jax.devices()[0]
        if dev.platform != "tpu":
            return 0
        kind = dev.device_kind.lower()
    except Exception:
        return 0
    for g in (7, 6, 5, 4):
        if "v%d" % g in kind:
            return g
    return 0


def _pick_batch_tile(B, gen):
    """Return (batch_tile, padded_batch)."""
    if B <= 128:
        return B, B                       # single full-extent tile
    if gen >= 7:
        # two TensorCores per chip: keep the parallel grid length >= 2
        Bt = 256 if B >= 512 else 128
    elif gen == 6:
        Bt = 256 if B >= 256 else 128     # 256-row LHS matches the 256-wide MXU
    else:
        Bt = 128                          # v5e (4x128 MXU) / unknown
    return Bt, _round_up(B, Bt)


def _vmem_limit_bytes(N, Bt, D, H, M, has_cov):
    per_step = (N * Bt * D * 2            # ctxs tile (bf16)
                + N * D * M * 2           # ctx_w (bf16, resident)
                + Bt * H * 2              # hid tile (bf16)
                + H * M * 2               # dec_w (bf16, resident)
                + 3 * M * 4               # bias / cov_w / mlp_w rows
                + (Bt * N * 4 if has_cov else 0)
                + 2 * Bt * N * 4          # att + coverage outputs
                + Bt * D * 4              # joint output
                + 4 * Bt * M * 4)         # in-kernel (Bt, M) intermediates
    limit = 2 * per_step + (8 << 20)      # double-buffering + compiler scratch
    return max(16 << 20, min(limit, 48 << 20))   # stays within v7x's 64 MiB


# ---------------------------------------------------------------------------
# Wrapper
# ---------------------------------------------------------------------------
def hierarchical_attention_coverage(contexts, hid, coverage, params):
    """contexts: list of (B, D) arrays (same D); hid: (B, H);
    coverage: (N, B, 1) or None; params holds PyTorch-shaped weights."""
    ctxs = jnp.stack(contexts, axis=0)                       # (N, B, D)
    N, B, D = ctxs.shape
    H = hid.shape[1]
    M = params['dec_w'].shape[0]
    has_cov = coverage is not None

    gen = _tpu_generation()
    Bt, B_pad = _pick_batch_tile(B, gen)
    nb = B_pad // Bt
    act_dtype = jnp.bfloat16 if gen >= 6 else jnp.float32    # v5e EUP has no bf16

    # bf16 MXU operands; accumulation stays f32 in-kernel.
    ctxs_b = ctxs.astype(jnp.bfloat16)
    hid_b = hid.astype(jnp.bfloat16)
    ctx_w = jnp.stack([w.T for w in params['ctx_w']], axis=0).astype(jnp.bfloat16)  # (N, D, M)
    dec_w = params['dec_w'].T.astype(jnp.bfloat16)                                  # (H, M)
    mlp_w = params['mlp_w'].reshape(1, M).astype(jnp.float32)

    if has_cov:
        cov_bn = coverage.reshape(N, B).T.astype(jnp.float32)     # (B, N)
        cov_w = params['cov_w'].reshape(1, M).astype(jnp.float32)
        b_total = (params['dec_b'] + params['cov_b']).reshape(1, M).astype(jnp.float32)
    else:
        b_total = params['dec_b'].reshape(1, M).astype(jnp.float32)

    if B_pad != B:
        pad = B_pad - B
        ctxs_b = jnp.pad(ctxs_b, ((0, 0), (0, pad), (0, 0)))
        hid_b = jnp.pad(hid_b, ((0, pad), (0, 0)))
        if has_cov:
            cov_bn = jnp.pad(cov_bn, ((0, pad), (0, 0)))

    in_specs = [
        pl.BlockSpec((N, Bt, D), lambda i: (0, i, 0)),   # ctxs batch tile
        pl.BlockSpec((N, D, M), lambda i: (0, 0, 0)),    # ctx_w (resident)
        pl.BlockSpec((Bt, H), lambda i: (i, 0)),         # hid batch tile
        pl.BlockSpec((H, M), lambda i: (0, 0)),          # dec_w (resident)
        pl.BlockSpec((1, M), lambda i: (0, 0)),          # dec_b (+ cov_b)
    ]
    args = [ctxs_b, ctx_w, hid_b, dec_w, b_total]
    if has_cov:
        in_specs += [pl.BlockSpec((Bt, N), lambda i: (i, 0)),   # coverage tile
                     pl.BlockSpec((1, M), lambda i: (0, 0))]    # cov_w row
        args += [cov_bn, cov_w]
    in_specs += [pl.BlockSpec((1, M), lambda i: (0, 0))]        # mlp_w row
    args += [mlp_w]

    out_specs = (
        pl.BlockSpec((Bt, N), lambda i: (i, 0)),         # att      (B_pad, N)
        pl.BlockSpec((Bt, D), lambda i: (i, 0)),         # joint    (B_pad, D)
        pl.BlockSpec((Bt, N), lambda i: (i, 0)),         # coverage (B_pad, N)
    )
    out_shape = (
        jax.ShapeDtypeStruct((B_pad, N), jnp.float32),
        jax.ShapeDtypeStruct((B_pad, D), jnp.float32),
        jax.ShapeDtypeStruct((B_pad, N), jnp.float32),
    )

    cost = pl.CostEstimate(
        flops=(2 * N * B_pad * D * M        # context projections
               + 2 * B_pad * H * M          # decoder projection
               + 6 * N * B_pad * M          # bias / coverage / mlp elementwise
               + 2 * N * B_pad * D),        # joint context
        transcendentals=N * B_pad * M + N * B_pad,
        bytes_accessed=int(N * B_pad * D * 2 + B_pad * H * 2 + N * D * M * 2
                           + H * M * 2 + 3 * M * 4
                           + (N * B_pad * 4 if has_cov else 0)
                           + (2 * N * B_pad + B_pad * D) * 4),
    )

    grid_spec = pltpu.PrefetchScalarGridSpec(
        num_scalar_prefetch=0,
        grid=(nb,),
        in_specs=in_specs,
        out_specs=out_specs,
    )

    att_bn, joint, cov_out_bn = pl.pallas_call(
        _make_kernel(N, has_cov, act_dtype),
        out_shape=out_shape,
        grid_spec=grid_spec,
        compiler_params=pltpu.CompilerParams(
            dimension_semantics=("parallel",),
            vmem_limit_bytes=_vmem_limit_bytes(N, Bt, D, H, M, has_cov)),
        cost_estimate=cost,
    )(*args)

    att = att_bn[:B].T.reshape(N, B, 1)
    cov_out = cov_out_bn[:B].T.reshape(N, B, 1)
    joint = joint[:B]
    return att, joint, cov_out


# ---------------------------------------------------------------------------
# Pure-JAX (f32) reference reproducing the PyTorch forward
# ---------------------------------------------------------------------------
def _reference(contexts, hid, coverage, params):
    ctxs = jnp.stack(contexts, axis=0)
    dec = hid @ params['dec_w'].T + params['dec_b']                    # (B, M)
    ctx_p = jnp.stack([c @ w.T for c, w in zip(contexts, params['ctx_w'])], 0)
    if coverage is not None:
        cov_feat = coverage @ params['cov_w'].T + params['cov_b']      # (N, B, M)
        pre = dec[None] + ctx_p + cov_feat
    else:
        pre = dec[None] + ctx_p
    energies = jnp.tanh(pre) @ params['mlp_w'].T                       # (N, B, 1)
    att = jax.nn.softmax(energies, axis=0)
    new_cov = coverage + att if coverage is not None else att
    joint = (att * ctxs).sum(0)
    return att, joint, new_cov


if __name__ == "__main__":
    root = jax.random.PRNGKey(0)

    def make_case(key, N, B, D, H, M, with_cov):
        ks = jax.random.split(key, 2 * N + 7)
        contexts = [jax.random.normal(ks[i], (B, D), jnp.float32) for i in range(N)]
        hid = jax.random.normal(ks[N], (B, H), jnp.float32)
        coverage = (jax.random.uniform(ks[N + 1], (N, B, 1), jnp.float32)
                    if with_cov else None)
        s = 0.1
        params = {
            'ctx_w': [s * jax.random.normal(ks[N + 2 + i], (M, D), jnp.float32)
                      for i in range(N)],                                        # Linear(D, M, bias=False)
            'dec_w': s * jax.random.normal(ks[2 * N + 2], (M, H), jnp.float32),  # Linear(H, M)
            'dec_b': s * jax.random.normal(ks[2 * N + 3], (M,), jnp.float32),
            'mlp_w': s * jax.random.normal(ks[2 * N + 4], (1, M), jnp.float32),  # Linear(M, 1, bias=False)
            'cov_w': s * jax.random.normal(ks[2 * N + 5], (M, 1), jnp.float32),  # Linear(1, M)
            'cov_b': s * jax.random.normal(ks[2 * N + 6], (M,), jnp.float32),
        }
        return contexts, hid, coverage, params

    # (N, B, D, H, M, with_coverage)
    cases = [
        (3, 8, 32, 32, 32, True),      # tiny single-tile path, with coverage
        (3, 8, 32, 32, 32, False),     # coverage = None branch (specialized kernel)
        (3, 256, 128, 64, 128, True),  # multi-tile / full-MXU path
        (3, 200, 64, 32, 64, True),    # ragged batch -> padded
    ]
    case_keys = jax.random.split(root, len(cases))
    for key, (N, B, D, H, M, with_cov) in zip(case_keys, cases):
        contexts, hid, coverage, params = make_case(key, N, B, D, H, M, with_cov)
        att, joint, cov_out = hierarchical_attention_coverage(
            contexts, hid, coverage, params)
        jax.block_until_ready((att, joint, cov_out))
        att_r, joint_r, cov_r = _reference(contexts, hid, coverage, params)
        # bf16 MXU operands / bf16 tanh (v6e+) -> loosened tolerance vs f32 ref.
        np.testing.assert_allclose(np.asarray(att), np.asarray(att_r),
                                   rtol=5e-2, atol=5e-2)
        np.testing.assert_allclose(np.asarray(joint), np.asarray(joint_r),
                                   rtol=5e-2, atol=5e-2)
        np.testing.assert_allclose(np.asarray(cov_out), np.asarray(cov_r),
                                   rtol=5e-2, atol=5e-2)

    print("KERNEL_OK")
</pallas_src>

<mosaic_0001>
module attributes {stable_mosaic.version = 11 : i64} {
  func.func @kernel(%arg0: i32, %arg1: memref<3x8x32xbf16, #tpu.memory_space<vmem>>, %arg2: memref<3x32x32xbf16, #tpu.memory_space<vmem>>, %arg3: memref<8x32xbf16, #tpu.memory_space<vmem>>, %arg4: memref<32x32xbf16, #tpu.memory_space<vmem>>, %arg5: memref<1x32xf32, #tpu.memory_space<vmem>>, %arg6: memref<8x3xf32, #tpu.memory_space<vmem>>, %arg7: memref<1x32xf32, #tpu.memory_space<vmem>>, %arg8: memref<1x32xf32, #tpu.memory_space<vmem>>, %arg9: memref<8x3xf32, #tpu.memory_space<vmem>>, %arg10: memref<8x32xf32, #tpu.memory_space<vmem>>, %arg11: memref<8x3xf32, #tpu.memory_space<vmem>>) attributes {dimension_semantics = [#tpu.dimension_semantics<parallel>], iteration_bounds = array<i64: 1>, scalar_prefetch = 0 : i64, scratch_operands = 0 : i64, tpu.core_type = #tpu.core_type<tc>, window_params = [{transform_indices = @transform_0, window_bounds = array<i64: 3, 8, 32>}, {pipeline_mode = #tpu.pipeline_mode<synchronous>, transform_indices = @transform_1, window_bounds = array<i64: 3, 32, 32>}, {transform_indices = @transform_2, window_bounds = array<i64: 8, 32>}, {pipeline_mode = #tpu.pipeline_mode<synchronous>, transform_indices = @transform_3, window_bounds = array<i64: 32, 32>}, {pipeline_mode = #tpu.pipeline_mode<synchronous>, transform_indices = @transform_4, window_bounds = array<i64: 1, 32>}, {transform_indices = @transform_5, window_bounds = array<i64: 8, 3>}, {pipeline_mode = #tpu.pipeline_mode<synchronous>, transform_indices = @transform_6, window_bounds = array<i64: 1, 32>}, {pipeline_mode = #tpu.pipeline_mode<synchronous>, transform_indices = @transform_7, window_bounds = array<i64: 1, 32>}, {transform_indices = @transform_8, window_bounds = array<i64: 8, 3>}, {transform_indices = @transform_9, window_bounds = array<i64: 8, 32>}, {transform_indices = @transform_10, window_bounds = array<i64: 8, 3>}]} {
    %c0 = arith.constant 0 : index
    %c0_0 = arith.constant 0 : index
    %0 = vector.load %arg3[%c0, %c0_0] : memref<8x32xbf16, #tpu.memory_space<vmem>>, vector<8x32xbf16>
    %c0_1 = arith.constant 0 : index
    %c0_2 = arith.constant 0 : index
    %1 = vector.load %arg4[%c0_1, %c0_2] : memref<32x32xbf16, #tpu.memory_space<vmem>>, vector<32x32xbf16>
    %cst = arith.constant dense<0.000000e+00> : vector<8x32xf32>
    %2 = tpu.matmul %0, %1, %cst {dimension_numbers = #tpu.dot_dimension_numbers<[1], [0], [0], [1], [0, 0, 1, 1], [], []>} : vector<8x32xbf16>, vector<32x32xbf16>, vector<8x32xf32> -> vector<8x32xf32>
    %c0_3 = arith.constant 0 : index
    %c0_4 = arith.constant 0 : index
    %3 = vector.load %arg5[%c0_3, %c0_4] : memref<1x32xf32, #tpu.memory_space<vmem>>, vector<1x32xf32>
    %4 = vector.broadcast %3 : vector<1x32xf32> to vector<8x32xf32>
    %5 = arith.addf %2, %4 : vector<8x32xf32>
    %c0_5 = arith.constant 0 : index
    %c0_6 = arith.constant 0 : index
    %6 = vector.load %arg8[%c0_5, %c0_6] : memref<1x32xf32, #tpu.memory_space<vmem>>, vector<1x32xf32>
    %c0_7 = arith.constant 0 : index
    %c0_8 = arith.constant 0 : index
    %7 = vector.load %arg6[%c0_7, %c0_8] : memref<8x3xf32, #tpu.memory_space<vmem>>, vector<8x3xf32>
    %c0_9 = arith.constant 0 : index
    %c0_10 = arith.constant 0 : index
    %8 = vector.load %arg7[%c0_9, %c0_10] : memref<1x32xf32, #tpu.memory_space<vmem>>, vector<1x32xf32>
    %c0_11 = arith.constant 0 : index
    %c0_12 = arith.constant 0 : index
    %c0_13 = arith.constant 0 : index
    %9 = vector.load %arg1[%c0_11, %c0_12, %c0_13] : memref<3x8x32xbf16, #tpu.memory_space<vmem>>, vector<1x8x32xbf16>
    %10 = vector.shape_cast %9 : vector<1x8x32xbf16> to vector<8x32xbf16>
    %c0_14 = arith.constant 0 : index
    %c0_15 = arith.constant 0 : index
    %c0_16 = arith.constant 0 : index
    %11 = vector.load %arg2[%c0_14, %c0_15, %c0_16] : memref<3x32x32xbf16, #tpu.memory_space<vmem>>, vector<1x32x32xbf16>
    %12 = vector.shape_cast %11 : vector<1x32x32xbf16> to vector<32x32xbf16>
    %cst_17 = arith.constant dense<0.000000e+00> : vector<8x32xf32>
    %13 = tpu.matmul %10, %12, %cst_17 {dimension_numbers = #tpu.dot_dimension_numbers<[1], [0], [0], [1], [0, 0, 1, 1], [], []>} : vector<8x32xbf16>, vector<32x32xbf16>, vector<8x32xf32> -> vector<8x32xf32>
    %14 = arith.addf %13, %5 : vector<8x32xf32>
    %15 = vector.extract_strided_slice %7 {offsets = [0, 0], sizes = [8, 1], strides = [1, 1]} : vector<8x3xf32> to vector<8x1xf32>
    %16 = vector.broadcast %15 : vector<8x1xf32> to vector<8x32xf32>
    %17 = vector.broadcast %8 : vector<1x32xf32> to vector<8x32xf32>
    %18 = arith.mulf %16, %17 : vector<8x32xf32>
    %19 = arith.addf %14, %18 : vector<8x32xf32>
    %20 = math.tanh %19 : vector<8x32xf32>
    %21 = vector.broadcast %6 : vector<1x32xf32> to vector<8x32xf32>
    %22 = arith.mulf %20, %21 : vector<8x32xf32>
    %cst_18 = arith.constant dense<0.000000e+00> : vector<8xf32>
    %23 = vector.multi_reduction <add>, %22, %cst_18 [1] : vector<8x32xf32> to vector<8xf32>
    %24 = vector.shape_cast %23 : vector<8xf32> to vector<8x1xf32>
    %c1 = arith.constant 1 : index
    %c0_19 = arith.constant 0 : index
    %c0_20 = arith.constant 0 : index
    %25 = vector.load %arg1[%c1, %c0_19, %c0_20] : memref<3x8x32xbf16, #tpu.memory_space<vmem>>, vector<1x8x32xbf16>
    %26 = vector.shape_cast %25 : vector<1x8x32xbf16> to vector<8x32xbf16>
    %c1_21 = arith.constant 1 : index
    %c0_22 = arith.constant 0 : index
    %c0_23 = arith.constant 0 : index
    %27 = vector.load %arg2[%c1_21, %c0_22, %c0_23] : memref<3x32x32xbf16, #tpu.memory_space<vmem>>, vector<1x32x32xbf16>
    %28 = vector.shape_cast %27 : vector<1x32x32xbf16> to vector<32x32xbf16>
    %cst_24 = arith.constant dense<0.000000e+00> : vector<8x32xf32>
    %29 = tpu.matmul %26, %28, %cst_24 {dimension_numbers = #tpu.dot_dimension_numbers<[1], [0], [0], [1], [0, 0, 1, 1], [], []>} : vector<8x32xbf16>, vector<32x32xbf16>, vector<8x32xf32> -> vector<8x32xf32>
    %30 = arith.addf %29, %5 : vector<8x32xf32>
    %31 = vector.extract_strided_slice %7 {offsets = [0, 1], sizes = [8, 1], strides = [1, 1]} : vector<8x3xf32> to vector<8x1xf32>
    %32 = vector.broadcast %31 : vector<8x1xf32> to vector<8x32xf32>
    %33 = vector.broadcast %8 : vector<1x32xf32> to vector<8x32xf32>
    %34 = arith.mulf %32, %33 : vector<8x32xf32>
    %35 = arith.addf %30, %34 : vector<8x32xf32>
    %36 = math.tanh %35 : vector<8x32xf32>
    %37 = vector.broadcast %6 : vector<1x32xf32> to vector<8x32xf32>
    %38 = arith.mulf %36, %37 : vector<8x32xf32>
    %cst_25 = arith.constant dense<0.000000e+00> : vector<8xf32>
    %39 = vector.multi_reduction <add>, %38, %cst_25 [1] : vector<8x32xf32> to vector<8xf32>
    %40 = vector.shape_cast %39 : vector<8xf32> to vector<8x1xf32>
    %c2 = arith.constant 2 : index
    %c0_26 = arith.constant 0 : index
    %c0_27 = arith.constant 0 : index
    %41 = vector.load %arg1[%c2, %c0_26, %c0_27] : memref<3x8x32xbf16, #tpu.memory_space<vmem>>, vector<1x8x32xbf16>
    %42 = vector.shape_cast %41 : vector<1x8x32xbf16> to vector<8x32xbf16>
    %c2_28 = arith.constant 2 : index
    %c0_29 = arith.constant 0 : index
    %c0_30 = arith.constant 0 : index
    %43 = vector.load %arg2[%c2_28, %c0_29, %c0_30] : memref<3x32x32xbf16, #tpu.memory_space<vmem>>, vector<1x32x32xbf16>
    %44 = vector.shape_cast %43 : vector<1x32x32xbf16> to vector<32x32xbf16>
    %cst_31 = arith.constant dense<0.000000e+00> : vector<8x32xf32>
    %45 = tpu.matmul %42, %44, %cst_31 {dimension_numbers = #tpu.dot_dimension_numbers<[1], [0], [0], [1], [0, 0, 1, 1], [], []>} : vector<8x32xbf16>, vector<32x32xbf16>, vector<8x32xf32> -> vector<8x32xf32>
    %46 = arith.addf %45, %5 : vector<8x32xf32>
    %47 = vector.extract_strided_slice %7 {offsets = [0, 2], sizes = [8, 1], strides = [1, 1]} : vector<8x3xf32> to vector<8x1xf32>
    %48 = vector.broadcast %47 : vector<8x1xf32> to vector<8x32xf32>
    %49 = vector.broadcast %8 : vector<1x32xf32> to vector<8x32xf32>
    %50 = arith.mulf %48, %49 : vector<8x32xf32>
    %51 = arith.addf %46, %50 : vector<8x32xf32>
    %52 = math.tanh %51 : vector<8x32xf32>
    %53 = vector.broadcast %6 : vector<1x32xf32> to vector<8x32xf32>
    %54 = arith.mulf %52, %53 : vector<8x32xf32>
    %cst_32 = arith.constant dense<0.000000e+00> : vector<8xf32>
    %55 = vector.multi_reduction <add>, %54, %cst_32 [1] : vector<8x32xf32> to vector<8xf32>
    %56 = vector.shape_cast %55 : vector<8xf32> to vector<8x1xf32>
    %57 = arith.maximumf %24, %40 : vector<8x1xf32>
    %58 = arith.maximumf %57, %56 : vector<8x1xf32>
    %59 = arith.subf %24, %58 : vector<8x1xf32>
    %60 = math.exp %59 : vector<8x1xf32>
    %61 = arith.subf %40, %58 : vector<8x1xf32>
    %62 = math.exp %61 : vector<8x1xf32>
    %63 = arith.subf %56, %58 : vector<8x1xf32>
    %64 = math.exp %63 : vector<8x1xf32>
    %65 = arith.addf %60, %62 : vector<8x1xf32>
    %66 = arith.addf %65, %64 : vector<8x1xf32>
    %67 = tpu.reciprocal %66 {approx = true} : vector<8x1xf32> -> vector<8x1xf32>
    %68 = arith.mulf %60, %67 : vector<8x1xf32>
    %69 = arith.mulf %62, %67 : vector<8x1xf32>
    %70 = arith.mulf %64, %67 : vector<8x1xf32>
    %71 = tpu.concatenate %68, %69, %70 in 1 : vector<8x1xf32>, vector<8x1xf32>, vector<8x1xf32> -> vector<8x3xf32>
    %c0_33 = arith.constant 0 : index
    %c0_34 = arith.constant 0 : index
    %72 = vector.load %arg9[%c0_33, %c0_34] : memref<8x3xf32, #tpu.memory_space<vmem>>, vector<8x3xf32>
    tpu.vector_store %arg9[%c0_33, %c0_34], %71 {strides = array<i32>} : memref<8x3xf32, #tpu.memory_space<vmem>>, vector<8x3xf32>,
    %73 = arith.addf %7, %71 : vector<8x3xf32>
    %c0_35 = arith.constant 0 : index
    %c0_36 = arith.constant 0 : index
    %74 = vector.load %arg11[%c0_35, %c0_36] : memref<8x3xf32, #tpu.memory_space<vmem>>, vector<8x3xf32>
    tpu.vector_store %arg11[%c0_35, %c0_36], %73 {strides = array<i32>} : memref<8x3xf32, #tpu.memory_space<vmem>>, vector<8x3xf32>,
    %c0_37 = arith.constant 0 : index
    %c0_38 = arith.constant 0 : index
    %c0_39 = arith.constant 0 : index
    %75 = vector.load %arg1[%c0_37, %c0_38, %c0_39] : memref<3x8x32xbf16, #tpu.memory_space<vmem>>, vector<1x8x32xbf16>
    %76 = vector.shape_cast %75 : vector<1x8x32xbf16> to vector<8x32xbf16>
    %77 = arith.extf %76 : vector<8x32xbf16> to vector<8x32xf32>
    %78 = vector.broadcast %68 : vector<8x1xf32> to vector<8x32xf32>
    %79 = arith.mulf %78, %77 : vector<8x32xf32>
    %c1_40 = arith.constant 1 : index
    %c0_41 = arith.constant 0 : index
    %c0_42 = arith.constant 0 : index
    %80 = vector.load %arg1[%c1_40, %c0_41, %c0_42] : memref<3x8x32xbf16, #tpu.memory_space<vmem>>, vector<1x8x32xbf16>
    %81 = vector.shape_cast %80 : vector<1x8x32xbf16> to vector<8x32xbf16>
    %82 = arith.extf %81 : vector<8x32xbf16> to vector<8x32xf32>
    %83 = vector.broadcast %69 : vector<8x1xf32> to vector<8x32xf32>
    %84 = arith.mulf %83, %82 : vector<8x32xf32>
    %85 = arith.addf %79, %84 : vector<8x32xf32>
    %c2_43 = arith.constant 2 : index
    %c0_44 = arith.constant 0 : index
    %c0_45 = arith.constant 0 : index
    %86 = vector.load %arg1[%c2_43, %c0_44, %c0_45] : memref<3x8x32xbf16, #tpu.memory_space<vmem>>, vector<1x8x32xbf16>
    %87 = vector.shape_cast %86 : vector<1x8x32xbf16> to vector<8x32xbf16>
    %88 = arith.extf %87 : vector<8x32xbf16> to vector<8x32xf32>
    %89 = vector.broadcast %70 : vector<8x1xf32> to vector<8x32xf32>
    %90 = arith.mulf %89, %88 : vector<8x32xf32>
    %91 = arith.addf %85, %90 : vector<8x32xf32>
    %c0_46 = arith.constant 0 : index
    %c0_47 = arith.constant 0 : index
    %92 = vector.load %arg10[%c0_46, %c0_47] : memref<8x32xf32, #tpu.memory_space<vmem>>, vector<8x32xf32>
    tpu.vector_store %arg10[%c0_46, %c0_47], %91 {strides = array<i32>} : memref<8x32xf32, #tpu.memory_space<vmem>>, vector<8x32xf32>,
    return
  }
  func.func @transform_0(%arg0: i32) -> (i32, i32, i32) {
    %c0_i32 = arith.constant 0 : i32
    %c0_i32_0 = arith.constant 0 : i32
    %c0_i32_1 = arith.constant 0 : i32
    return %c0_i32, %arg0, %c0_i32_0 : i32, i32, i32
  }
  func.func @transform_1(%arg0: i32) -> (i32, i32, i32) {
    %c0_i32 = arith.constant 0 : i32
    %c0_i32_0 = arith.constant 0 : i32
    %c0_i32_1 = arith.constant 0 : i32
    %c0_i32_2 = arith.constant 0 : i32
    return %c0_i32, %c0_i32_0, %c0_i32_1 : i32, i32, i32
  }
  func.func @transform_2(%arg0: i32) -> (i32, i32) {
    %c0_i32 = arith.constant 0 : i32
    %c0_i32_0 = arith.constant 0 : i32
    return %arg0, %c0_i32 : i32, i32
  }
  func.func @transform_3(%arg0: i32) -> (i32, i32) {
    %c0_i32 = arith.constant 0 : i32
    %c0_i32_0 = arith.constant 0 : i32
    %c0_i32_1 = arith.constant 0 : i32
    return %c0_i32, %c0_i32_0 : i32, i32
  }
  func.func @transform_4(%arg0: i32) -> (i32, i32) {
    %c0_i32 = arith.constant 0 : i32
    %c0_i32_0 = arith.constant 0 : i32
    %c0_i32_1 = arith.constant 0 : i32
    return %c0_i32, %c0_i32_0 : i32, i32
  }
  func.func @transform_5(%arg0: i32) -> (i32, i32) {
    %c0_i32 = arith.constant 0 : i32
    %c0_i32_0 = arith.constant 0 : i32
    return %arg0, %c0_i32 : i32, i32
  }
  func.func @transform_6(%arg0: i32) -> (i32, i32) {
    %c0_i32 = arith.constant 0 : i32
    %c0_i32_0 = arith.constant 0 : i32
    %c0_i32_1 = arith.constant 0 : i32
    return %c0_i32, %c0_i32_0 : i32, i32
  }
  func.func @transform_7(%arg0: i32) -> (i32, i32) {
    %c0_i32 = arith.constant 0 : i32
    %c0_i32_0 = arith.constant 0 : i32
    %c0_i32_1 = arith.constant 0 : i32
    return %c0_i32, %c0_i32_0 : i32, i32
  }
  func.func @transform_8(%arg0: i32) -> (i32, i32) {
    %c0_i32 = arith.constant 0 : i32
    %c0_i32_0 = arith.constant 0 : i32
    return %arg0, %c0_i32 : i32, i32
  }
  func.func @transform_9(%arg0: i32) -> (i32, i32) {
    %c0_i32 = arith.constant 0 : i32
    %c0_i32_0 = arith.constant 0 : i32
    return %arg0, %c0_i32 : i32, i32
  }
  func.func @transform_10(%arg0: i32) -> (i32, i32) {
    %c0_i32 = arith.constant 0 : i32
    %c0_i32_0 = arith.constant 0 : i32
    return %arg0, %c0_i32 : i32, i32
  }
}

</mosaic_0001>

<llo_original>
// kernel: tpu_custom_call.1
$region0: #{tpu_custom_call.1}
  #allocation0 [shape = 'u32[]', space=smem, size = 0x4, offset = 0x4, fixed_abs, tag = 'smem constant byte address 0x4 - core index']
  #allocation1 [shape = 'u32[144,128]{1,0:T(1,128)}', space=vmem, size = 0x12000, scoped, tag = 'internal scratch']
  %s0 = inlined_call_operand.hbm [shape: bf16[3,8,32], index: 0, kind: input, shape index: {}]
  %s1 = inlined_call_operand.hbm [shape: bf16[3,32,32], index: 1, kind: input, shape index: {}]
  %s2 = inlined_call_operand.vmem [shape: bf16[8,32], index: 2, kind: input, shape index: {}]
  %s3 = inlined_call_operand.vmem [shape: bf16[32,32], index: 3, kind: input, shape index: {}]
  %s4 = inlined_call_operand.vmem [shape: f32[1,32], index: 4, kind: input, shape index: {}]
  %s5 = inlined_call_operand.vmem [shape: f32[8,3], index: 5, kind: input, shape index: {}]
  %s6 = inlined_call_operand.vmem [shape: f32[1,32], index: 6, kind: input, shape index: {}]
  %s7 = inlined_call_operand.vmem [shape: f32[1,32], index: 7, kind: input, shape index: {}]
  %s8 = inlined_call_operand.vmem [shape: f32[8,3], index: 8, kind: output, shape index: {0}]
  %s9 = inlined_call_operand.hbm [shape: f32[8,32], index: 9, kind: output, shape index: {1}]
  %s10 = inlined_call_operand.vmem [shape: f32[8,3], index: 10, kind: output, shape index: {2}]
  %11 = xla_tuple %s8, %s9, %s10
  %s12 = sld [smem:[#allocation0]]
  $region66: #{tpu_custom_call.1} parent=0
    _
  %s14 = ssub.s32 1, %s12
  %s15 = scalar_select 0, %s14, %s12
  $region1: #{tpu_custom_call.1} parent=0
    #allocation2 [shape = 'u8[6144]{0}', space=vmem, size = 0x1800, scoped, tag = 'input window, operand 0, single buffered']
    #allocation3 [shape = 's32[1]{0}', space=sflag, size = 0x4, scoped, tag = 'scoped memory for tpu_custom_call.1']
    #allocation4 [shape = 's32[1]{0}', space=sflag, size = 0x4, scoped, tag = 'scoped memory for tpu_custom_call.1']
    #allocation5 [shape = 'u8[24576]{0}', space=vmem, size = 0x6000, scoped, tag = 'input window, operand 1, single buffered']
    #allocation6 [shape = 's32[1]{0}', space=sflag, size = 0x4, scoped, tag = 'scoped memory for tpu_custom_call.1']
    #allocation7 [shape = 'u8[4096]{0}', space=vmem, size = 0x1000, scoped, tag = 'output window, operand 1, single buffered']
    %16 = vsyncpa [#allocation3], 0
    %17 = vsyncpa [#allocation6], 0
    %18 = vsyncpa [#allocation4], 0
    // Predicated region
    $region2: #{tpu_custom_call.1} parent=1 // pred_check
      _
    $region3: #{tpu_custom_call.1} parent=1 // pred_check_branch
      %20 = sbr.rel (0) target = $region5
    $region4: #{tpu_custom_call.1} parent=1 // pred_region
      %s22 = ssub.s32 192, 192
      %23 = vsyncadd [#allocation3], %s22
      %s24 = sshll.u32 [#allocation2], 4
      %s25 = int_to_ptr.vmem [resolvable:$true] %s24
      %30 = dma.hbm_to_vmem [thread:$0]  %s0, 192, %s25, [#allocation3], 64, 64, 4
    $region5: #{tpu_custom_call.1} parent=1 // pred_fallthru
      _
    // Predicated region
    $region6: #{tpu_custom_call.1} parent=1 // pred_check
      _
    $region7: #{tpu_custom_call.1} parent=1 // pred_check_branch
      %32 = sbr.rel (0) target = $region9
    $region8: #{tpu_custom_call.1} parent=1 // pred_region
      %s34 = ssub.s32 768, 768
      %35 = vsyncadd [#allocation6], %s34
      %s36 = sshll.u32 [#allocation5], 4
      %s37 = int_to_ptr.vmem [resolvable:$true] %s36
      %42 = dma.hbm_to_vmem [thread:$0]  %s1, 768, %s37, [#allocation6], 64, 64, 4
    $region9: #{tpu_custom_call.1} parent=1 // pred_fallthru
      _
    // Predicated region
    $region10: #{tpu_custom_call.1} parent=1 // pred_check
      _
    $region11: #{tpu_custom_call.1} parent=1 // pred_check_branch
      %44 = sbr.rel (0) target = $region13
    $region12: #{tpu_custom_call.1} parent=1 // pred_region
      _
    $region13: #{tpu_custom_call.1} parent=1 // pred_fallthru
      _
    // Predicated region
    $region14: #{tpu_custom_call.1} parent=1 // pred_check
      _
    $region15: #{tpu_custom_call.1} parent=1 // pred_check_branch
      %46 = sbr.rel (0) target = $region17
    $region16: #{tpu_custom_call.1} parent=1 // pred_region
      _
    $region17: #{tpu_custom_call.1} parent=1 // pred_fallthru
      _
    // Predicated region
    $region18: #{tpu_custom_call.1} parent=1 // pred_check
      _
    $region19: #{tpu_custom_call.1} parent=1 // pred_check_branch
      %48 = sbr.rel (0) target = $region21
    $region20: #{tpu_custom_call.1} parent=1 // pred_region
      _
    $region21: #{tpu_custom_call.1} parent=1 // pred_fallthru
      _
    // Predicated region
    $region22: #{tpu_custom_call.1} parent=1 // pred_check
      _
    $region23: #{tpu_custom_call.1} parent=1 // pred_check_branch
      %50 = sbr.rel (0) target = $region25
    $region24: #{tpu_custom_call.1} parent=1 // pred_region
      _
    $region25: #{tpu_custom_call.1} parent=1 // pred_fallthru
      _
    // Predicated region
    $region26: #{tpu_custom_call.1} parent=1 // pred_check
      _
    $region27: #{tpu_custom_call.1} parent=1 // pred_check_branch
      %52 = sbr.rel (0) target = $region29
    $region28: #{tpu_custom_call.1} parent=1 // pred_region
      _
    $region29: #{tpu_custom_call.1} parent=1 // pred_fallthru
      _
    // Predicated region
    $region30: #{tpu_custom_call.1} parent=1 // pred_check
      _
    $region31: #{tpu_custom_call.1} parent=1 // pred_check_branch
      %54 = sbr.rel (0) target = $region33
    $region32: #{tpu_custom_call.1} parent=1 // pred_region
      _
    $region33: #{tpu_custom_call.1} parent=1 // pred_fallthru
      _
    // Predicated region
    $region34: #{tpu_custom_call.1} parent=1 // pred_check
      _
    $region35: #{tpu_custom_call.1} parent=1 // pred_check_branch
      %56 = sbr.rel (0) target = $region37
    $region36: #{tpu_custom_call.1} parent=1 // pred_region
      %57 = dma.done [#allocation3], 192
    $region37: #{tpu_custom_call.1} parent=1 // pred_fallthru
      _
    // Predicated region
    $region38: #{tpu_custom_call.1} parent=1 // pred_check
      _
    $region39: #{tpu_custom_call.1} parent=1 // pred_check_branch
      %59 = sbr.rel (0) target = $region41
    $region40: #{tpu_custom_call.1} parent=1 // pred_region
      %60 = dma.done [#allocation6], 768
    $region41: #{tpu_custom_call.1} parent=1 // pred_fallthru
      _
    %v62 = vld [vmem:[%s2] sm:$0xf]
    %v63 = vld [vmem:[%s3] sm:$0xf]
    %v64 = vld [vmem:[%s3 + $0x4] sm:$0xf]
    %v65 = vld [vmem:[%s3 + $0x8] sm:$0xf]
    %v66 = vld [vmem:[%s3 + $0xc] sm:$0xf]
    %v67 = vld [vmem:[%s4] sm:$0x1]
    %v69 = vlaneseq
    %v70 = vshrl.u32 %v69, 7
    %v71 = vsub.s32 0, %v70
    %v72 = vrot.slane %v67, %v71
    %v78 = vunpack.c.l.b16 %v63
    %v79 = vunpack.c.l.b16 %v64
    %v80 = vunpack.c.l.b16 %v65
    %v81 = vunpack.c.l.b16 %v66
    %v82 = vpack.c.b16 %v79, %v78
    %v83 = vpack.c.b16 %v81, %v80
    %vm86 = vcmask 261120
    %v88 = vsel %vm86, %v62, 0
    %90 = vmatprep.subr.bf16.mxu0 0
    %91 = vmatpush1.bf16.msra.mxu0 %v82
    %92 = vmatprep.subr.bf16.mxu0 0
    %93 = vmatpush1.bf16.msra.mxu0 %v83
    %94 = vmatprep.subr.bf16.mxu0 0
    %95 = vmatpush1.bf16.msra.mxu0 0
    %96 = vmatprep.subr.bf16.mxu0 0
    %97 = vmatpush1.bf16.msra.mxu0 0
    %98 = vmatprep.subr.bf16.mxu0 0
    %99 = vmatpush1.bf16.msra.mxu0 0
    %100 = vmatprep.subr.bf16.mxu0 0
    %101 = vmatpush1.bf16.msra.mxu0 0
    %102 = vmatprep.subr.bf16.mxu0 0
    %103 = vmatpush1.bf16.msra.mxu0 0
    %104 = vmatprep.subr.bf16.mxu0 0
    %105 = vmatpush1.bf16.msra.mxu0 0
    %106 = vmatprep.subr.bf16.mxu0 0
    %107 = vmatpush1.bf16.msra.mxu0 0
    %108 = vmatprep.subr.bf16.mxu0 0
    %109 = vmatpush1.bf16.msra.mxu0 0
    %110 = vmatprep.subr.bf16.mxu0 0
    %111 = vmatpush1.bf16.msra.mxu0 0
    %112 = vmatprep.subr.bf16.mxu0 0
    %113 = vmatpush1.bf16.msra.mxu0 0
    %114 = vmatprep.subr.bf16.mxu0 0
    %115 = vmatpush1.bf16.msra.mxu0 0
    %116 = vmatprep.subr.bf16.mxu0 0
    %117 = vmatpush1.bf16.msra.mxu0 0
    %118 = vmatprep.subr.bf16.mxu0 0
    %119 = vmatpush1.bf16.msra.mxu0 0
    %120 = vmatprep.subr.bf16.mxu0 0
    %121 = vmatpush1.bf16.msra.mxu0 0
    %122 = vmatprep.mubr.bf16.mxu0 0
    %123 = vmatmul.mubr.bf16.gmra.mrb[0].mxu0 %v88
    %v124 = vpop.f32.mrb[0].mxu0
    %v125 = vadd.f32 %v72, %v124
    %v126 = vpop.f32.mrb[0].mxu0
    %v127 = vpop.f32.mrb[0].mxu0
    %v128 = vpop.f32.mrb[0].mxu0
    %129 = vdwg.mxu0
    %v130 = vld [vmem:[%s7] sm:$0x1]
    %v131 = vld [vmem:[%s5] sm:$0xff]
    %v132 = vld [vmem:[%s6] sm:$0x1]
    %v133 = vld [vmem:[#allocation2] sm:$0xf]
    %v134 = vld [vmem:[#allocation5] sm:$0xf]
    %v135 = vld [vmem:[#allocation5 + $0x4] sm:$0xf]
    %v136 = vld [vmem:[#allocation5 + $0x8] sm:$0xf]
    %v137 = vld [vmem:[#allocation5 + $0xc] sm:$0xf]
    %v142 = vunpack.c.l.b16 %v134
    %v143 = vunpack.c.l.b16 %v135
    %v144 = vunpack.c.l.b16 %v136
    %v145 = vunpack.c.l.b16 %v137
    %v146 = vpack.c.b16 %v143, %v142
    %v147 = vpack.c.b16 %v145, %v144
    %v151 = vsel %vm86, %v133, 0
    %153 = vmatprep.subr.bf16.mxu0 0
    %154 = vmatpush1.bf16.msra.mxu0 %v146
    %155 = vmatprep.subr.bf16.mxu0 0
    %156 = vmatpush1.bf16.msra.mxu0 %v147
    %157 = vmatprep.subr.bf16.mxu0 0
    %158 = vmatpush1.bf16.msra.mxu0 0
    %159 = vmatprep.subr.bf16.mxu0 0
    %160 = vmatpush1.bf16.msra.mxu0 0
    %161 = vmatprep.subr.bf16.mxu0 0
    %162 = vmatpush1.bf16.msra.mxu0 0
    %163 = vmatprep.subr.bf16.mxu0 0
    %164 = vmatpush1.bf16.msra.mxu0 0
    %165 = vmatprep.subr.bf16.mxu0 0
    %166 = vmatpush1.bf16.msra.mxu0 0
    %167 = vmatprep.subr.bf16.mxu0 0
    %168 = vmatpush1.bf16.msra.mxu0 0
    %169 = vmatprep.subr.bf16.mxu0 0
    %170 = vmatpush1.bf16.msra.mxu0 0
    %171 = vmatprep.subr.bf16.mxu0 0
    %172 = vmatpush1.bf16.msra.mxu0 0
    %173 = vmatprep.subr.bf16.mxu0 0
    %174 = vmatpush1.bf16.msra.mxu0 0
    %175 = vmatprep.subr.bf16.mxu0 0
    %176 = vmatpush1.bf16.msra.mxu0 0
    %177 = vmatprep.subr.bf16.mxu0 0
    %178 = vmatpush1.bf16.msra.mxu0 0
    %179 = vmatprep.subr.bf16.mxu0 0
    %180 = vmatpush1.bf16.msra.mxu0 0
    %181 = vmatprep.subr.bf16.mxu0 0
    %182 = vmatpush1.bf16.msra.mxu0 0
    %183 = vmatprep.subr.bf16.mxu0 0
    %184 = vmatpush1.bf16.msra.mxu0 0
    %185 = vmatprep.mubr.bf16.mxu0 0
    %186 = vmatmul.mubr.bf16.gmra.mrb[0].mxu0 %v151
    %v187 = vpop.f32.mrb[0].mxu0
    %v188 = vadd.f32 %v125, %v187
    %v189 = vpop.f32.mrb[0].mxu0
    %v190 = vpop.f32.mrb[0].mxu0
    %v191 = vpop.f32.mrb[0].mxu0
    %192 = vdwg.mxu0
    %194 = vset.pattern.permute.xlu0 0
    %195 = vperm.xlu0 %194, %v131
    %v196 = vpop.permute.xlu0 %195
    %v199 = vlaneseq
    %v200 = vshrl.u32 %v199, 7
    %v201 = vsub.s32 0, %v200
    %v202 = vrot.slane %v132, %v201
    %v204 = vmul.f32 %v196, %v202
    %v205 = vadd.f32 %v188, %v204
    %v206 = vtanh.pop %v205
    %v208 = vlaneseq
    %v209 = vshrl.u32 %v208, 7
    %v210 = vsub.s32 0, %v209
    %v211 = vrot.slane %v130, %v210
    %v213 = vmul.f32 %v206, %v211
    %v214 = vsel %vm86, %v213, 0.0
    %215 = vadd.xlane.f32.xlu0 %v214
    %v216 = vpop.xlane.xlu0 %215
    %s217 = scalar_lea.vmem [#allocation2], 4
    %v218 = vld [vmem:[%s217] sm:$0xf]
    %s219 = scalar_lea.vmem [#allocation5], 16
    %v220 = vld [vmem:[%s219] sm:$0xf]
    %v221 = vld [vmem:[%s219 + $0x4] sm:$0xf]
    %v222 = vld [vmem:[%s219 + $0x8] sm:$0xf]
    %v223 = vld [vmem:[%s219 + $0xc] sm:$0xf]
    %v228 = vunpack.c.l.b16 %v220
    %v229 = vunpack.c.l.b16 %v221
    %v230 = vunpack.c.l.b16 %v222
    %v231 = vunpack.c.l.b16 %v223
    %v232 = vpack.c.b16 %v229, %v228
    %v233 = vpack.c.b16 %v231, %v230
    %v237 = vsel %vm86, %v218, 0
    %239 = vmatprep.subr.bf16.mxu0 0
    %240 = vmatpush1.bf16.msra.mxu0 %v232
    %241 = vmatprep.subr.bf16.mxu0 0
    %242 = vmatpush1.bf16.msra.mxu0 %v233
    %243 = vmatprep.subr.bf16.mxu0 0
    %244 = vmatpush1.bf16.msra.mxu0 0
    %245 = vmatprep.subr.bf16.mxu0 0
    %246 = vmatpush1.bf16.msra.mxu0 0
    %247 = vmatprep.subr.bf16.mxu0 0
    %248 = vmatpush1.bf16.msra.mxu0 0
    %249 = vmatprep.subr.bf16.mxu0 0
    %250 = vmatpush1.bf16.msra.mxu0 0
    %251 = vmatprep.subr.bf16.mxu0 0
    %252 = vmatpush1.bf16.msra.mxu0 0
    %253 = vmatprep.subr.bf16.mxu0 0
    %254 = vmatpush1.bf16.msra.mxu0 0
    %255 = vmatprep.subr.bf16.mxu0 0
    %256 = vmatpush1.bf16.msra.mxu0 0
    %257 = vmatprep.subr.bf16.mxu0 0
    %258 = vmatpush1.bf16.msra.mxu0 0
    %259 = vmatprep.subr.bf16.mxu0 0
    %260 = vmatpush1.bf16.msra.mxu0 0
    %261 = vmatprep.subr.bf16.mxu0 0
    %262 = vmatpush1.bf16.msra.mxu0 0
    %263 = vmatprep.subr.bf16.mxu0 0
    %264 = vmatpush1.bf16.msra.mxu0 0
    %265 = vmatprep.subr.bf16.mxu0 0
    %266 = vmatpush1.bf16.msra.mxu0 0
    %267 = vmatprep.subr.bf16.mxu0 0
    %268 = vmatpush1.bf16.msra.mxu0 0
    %269 = vmatprep.subr.bf16.mxu0 0
    %270 = vmatpush1.bf16.msra.mxu0 0
    %271 = vmatprep.mubr.bf16.mxu0 0
    %272 = vmatmul.mubr.bf16.gmra.mrb[0].mxu0 %v237
    %v273 = vpop.f32.mrb[0].mxu0
    %v274 = vadd.f32 %v125, %v273
    %v275 = vpop.f32.mrb[0].mxu0
    %v276 = vpop.f32.mrb[0].mxu0
    %v277 = vpop.f32.mrb[0].mxu0
    %278 = vdwg.mxu0
    %279 = vset.pattern.permute.xlu0 1
    %280 = vperm.xlu0 %279, %v131
    %v281 = vpop.permute.xlu0 %280
    %v283 = vmul.f32 %v281, %v202
    %v284 = vadd.f32 %v274, %v283
    %v285 = vtanh.pop %v284
    %v286 = vmul.f32 %v285, %v211
    %v287 = vsel %vm86, %v286, 0.0
    %288 = vadd.xlane.f32.xlu0 %v287
    %v289 = vpop.xlane.xlu0 %288
    %s290 = scalar_lea.vmem [#allocation2], 8
    %v291 = vld [vmem:[%s290] sm:$0xf]
    %s292 = scalar_lea.vmem [#allocation5], 32
    %v293 = vld [vmem:[%s292] sm:$0xf]
    %v294 = vld [vmem:[%s292 + $0x4] sm:$0xf]
    %v295 = vld [vmem:[%s292 + $0x8] sm:$0xf]
    %v296 = vld [vmem:[%s292 + $0xc] sm:$0xf]
    %v301 = vunpack.c.l.b16 %v293
    %v302 = vunpack.c.l.b16 %v294
    %v303 = vunpack.c.l.b16 %v295
    %v304 = vunpack.c.l.b16 %v296
    %v305 = vpack.c.b16 %v302, %v301
    %v306 = vpack.c.b16 %v304, %v303
    %v310 = vsel %vm86, %v291, 0
    %312 = vmatprep.subr.bf16.mxu0 0
    %313 = vmatpush1.bf16.msra.mxu0 %v305
    %314 = vmatprep.subr.bf16.mxu0 0
    %315 = vmatpush1.bf16.msra.mxu0 %v306
    %316 = vmatprep.subr.bf16.mxu0 0
    %317 = vmatpush1.bf16.msra.mxu0 0
    %318 = vmatprep.subr.bf16.mxu0 0
    %319 = vmatpush1.bf16.msra.mxu0 0
    %320 = vmatprep.subr.bf16.mxu0 0
    %321 = vmatpush1.bf16.msra.mxu0 0
    %322 = vmatprep.subr.bf16.mxu0 0
    %323 = vmatpush1.bf16.msra.mxu0 0
    %324 = vmatprep.subr.bf16.mxu0 0
    %325 = vmatpush1.bf16.msra.mxu0 0
    %326 = vmatprep.subr.bf16.mxu0 0
    %327 = vmatpush1.bf16.msra.mxu0 0
    %328 = vmatprep.subr.bf16.mxu0 0
    %329 = vmatpush1.bf16.msra.mxu0 0
    %330 = vmatprep.subr.bf16.mxu0 0
    %331 = vmatpush1.bf16.msra.mxu0 0
    %332 = vmatprep.subr.bf16.mxu0 0
    %333 = vmatpush1.bf16.msra.mxu0 0
    %334 = vmatprep.subr.bf16.mxu0 0
    %335 = vmatpush1.bf16.msra.mxu0 0
    %336 = vmatprep.subr.bf16.mxu0 0
    %337 = vmatpush1.bf16.msra.mxu0 0
    %338 = vmatprep.subr.bf16.mxu0 0
    %339 = vmatpush1.bf16.msra.mxu0 0
    %340 = vmatprep.subr.bf16.mxu0 0
    %341 = vmatpush1.bf16.msra.mxu0 0
    %342 = vmatprep.subr.bf16.mxu0 0
    %343 = vmatpush1.bf16.msra.mxu0 0
    %344 = vmatprep.mubr.bf16.mxu0 0
    %345 = vmatmul.mubr.bf16.gmra.mrb[0].mxu0 %v310
    %v346 = vpop.f32.mrb[0].mxu0
    %v347 = vadd.f32 %v125, %v346
    %v348 = vpop.f32.mrb[0].mxu0
    %v349 = vpop.f32.mrb[0].mxu0
    %v350 = vpop.f32.mrb[0].mxu0
    %351 = vdwg.mxu0
    %352 = vset.pattern.permute.xlu0 2
    %353 = vperm.xlu0 %352, %v131
    %v354 = vpop.permute.xlu0 %353
    %v356 = vmul.f32 %v354, %v202
    %v357 = vadd.f32 %v347, %v356
    %v358 = vtanh.pop %v357
    %v359 = vmul.f32 %v358, %v211
    %v360 = vsel %vm86, %v359, 0.0
    %361 = vadd.xlane.f32.xlu0 %v360
    %v362 = vpop.xlane.xlu0 %361
    %v363 = vmax.f32 %v216, %v289
    %v364 = vmax.f32 %v363, %v362
    %v365 = vsub.f32 %v216, %v364
    %v366 = vmul.f32 %v365, 1.442695
    %v367 = vpow.pop %v366
    %v368 = vsub.f32 %v289, %v364
    %v369 = vmul.f32 %v368, 1.442695
    %v370 = vpow.pop %v369
    %v371 = vsub.f32 %v362, %v364
    %v372 = vmul.f32 %v371, 1.442695
    %v373 = vpow.pop %v372
    %v374 = vadd.f32 %v367, %v370
    %v375 = vadd.f32 %v374, %v373
    %v376 = vrcp.pop %v375
    %v377 = vmul.f32 %v367, %v376
    %v378 = vmul.f32 %v370, %v376
    %v379 = vmul.f32 %v373, %v376
    %vm380 = vcmask 7168
    %v381 = vsel %vm380, %v377, %v378
    %vm382 = vcmask 15360
    %v383 = vsel %vm382, %v381, %v379
    %vm384 = vcmask 23552
    %385 = vst.msk [vmem:[%s8] sm:$0xff] %vm384, %v383
    %v386 = vadd.f32 %v131, %v383
    %387 = vst.msk [vmem:[%s10] sm:$0xff] %vm384, %v386
    %v388 = vld [vmem:[#allocation2] sm:$0xf]
    %v389 = vunpack.c.l.bf16 %v388
    %v390 = vmul.f32 %v377, %v389
    %v391 = vld [vmem:[%s217] sm:$0xf]
    %v392 = vunpack.c.l.bf16 %v391
    %v393 = vmul.f32 %v378, %v392
    %v394 = vadd.f32 %v390, %v393
    %v395 = vld [vmem:[%s290] sm:$0xf]
    %v396 = vunpack.c.l.bf16 %v395
    %v397 = vmul.f32 %v379, %v396
    %v398 = vadd.f32 %v394, %v397
    %399 = vst.msk [vmem:[#allocation7] sm:$0xff] %vm86, %v398
    // Predicated region
    $region42: #{tpu_custom_call.1} parent=1 // pred_check
      _
    $region43: #{tpu_custom_call.1} parent=1 // pred_check_branch
      %401 = sbr.rel (0) target = $region45
    $region44: #{tpu_custom_call.1} parent=1 // pred_region
      _
    $region45: #{tpu_custom_call.1} parent=1 // pred_fallthru
      _
    // Predicated region
    $region46: #{tpu_custom_call.1} parent=1 // pred_check
      _
    $region47: #{tpu_custom_call.1} parent=1 // pred_check_branch
      %403 = sbr.rel (0) target = $region49
    $region48: #{tpu_custom_call.1} parent=1 // pred_region
      %s405 = ssub.s32 128, 128
      %406 = vsyncadd [#allocation4], %s405
      %s408 = sshll.u32 [#allocation7], 4
      %s409 = int_to_ptr.vmem [resolvable:$true] %s408
      %411 = dma.vmem_to_hbm [thread:$0]  %s409, 128, %s9, [#allocation4]
    $region49: #{tpu_custom_call.1} parent=1 // pred_fallthru
      _
    // Predicated region
    $region50: #{tpu_custom_call.1} parent=1 // pred_check
      _
    $region51: #{tpu_custom_call.1} parent=1 // pred_check_branch
      %413 = sbr.rel (0) target = $region53
    $region52: #{tpu_custom_call.1} parent=1 // pred_region
      _
    $region53: #{tpu_custom_call.1} parent=1 // pred_fallthru
      _
    // Predicated region
    $region54: #{tpu_custom_call.1} parent=1 // pred_check
      _
    $region55: #{tpu_custom_call.1} parent=1 // pred_check_branch
      %415 = sbr.rel (0) target = $region57
    $region56: #{tpu_custom_call.1} parent=1 // pred_region
      _
    $region57: #{tpu_custom_call.1} parent=1 // pred_fallthru
      _
    // Predicated region
    $region58: #{tpu_custom_call.1} parent=1 // pred_check
      _
    $region59: #{tpu_custom_call.1} parent=1 // pred_check_branch
      %417 = sbr.rel (0) target = $region61
    $region60: #{tpu_custom_call.1} parent=1 // pred_region
      %418 = dma.done [#allocation4], 128
    $region61: #{tpu_custom_call.1} parent=1 // pred_fallthru
      _
    // Predicated region
    $region62: #{tpu_custom_call.1} parent=1 // pred_check
      _
    $region63: #{tpu_custom_call.1} parent=1 // pred_check_branch
      %420 = sbr.rel (0) target = $region65
    $region64: #{tpu_custom_call.1} parent=1 // pred_region
      _
    $region65: #{tpu_custom_call.1} parent=1 // pred_fallthru
      _
    %421 = vsyncpa [#allocation3], 1
    %422 = vsyncpa [#allocation6], 1
    %423 = vsyncpa [#allocation4], 1

</llo_original>
